<compile_context>
chip_gen: v6e
topology: v6e:2x2x1
jax: 0.10.0
libtpu: 0.0.40
codegen_flags: <defaults>
</compile_context>

<pallas_src>
import functools

import jax
import jax.numpy as jnp
from jax import lax
from jax.experimental import pallas as pl
from jax.experimental.pallas import tpu as pltpu

EPS = 1e-5


def _round_up(n, m):
    return ((n + m - 1) // m) * m


# ----------------------------- conv + BN + act (two-phase, tiled) -----------------------------

def _conv_stats_kernel(w_ref, colsT_ref, gamma_ref, beta_ref,
                       y_ref, scale_ref, shift_ref, sum_s, ssq_s, *, m_total, eps):
    """Phase 1: tiled matmul (lane-dense y store) + per-channel sum / sumsq accumulation.

    On the last M-tile, converts the accumulated stats into BN scale/shift.
    """
    i = pl.program_id(0)
    n_m = pl.num_programs(0)

    @pl.when(i == 0)
    def _():
        sum_s[...] = jnp.zeros_like(sum_s)
        ssq_s[...] = jnp.zeros_like(ssq_s)

    y = jnp.dot(w_ref[...], colsT_ref[...], preferred_element_type=jnp.float32)
    y_ref[...] = y

    tn = y.shape[1]
    lane = lax.broadcasted_iota(jnp.int32, (1, tn), 1) + i * tn
    ym = jnp.where(lane < m_total, y, 0.0)          # mask ragged tail out of the stats
    sum_s[...] += jnp.sum(ym, axis=1, keepdims=True)
    ssq_s[...] += jnp.sum(ym * ym, axis=1, keepdims=True)

    @pl.when(i == n_m - 1)
    def _():
        inv_m = 1.0 / float(m_total)
        mean = sum_s[...] * inv_m
        var = jnp.maximum(ssq_s[...] * inv_m - mean * mean, 0.0)
        scale = gamma_ref[...] * lax.rsqrt(var + eps)
        scale_ref[...] = scale
        shift_ref[...] = beta_ref[...] - mean * scale


def _bn_act_kernel(y_ref, scale_ref, shift_ref, o_ref, *, slope):
    """Phase 2: normalize + (Leaky)ReLU, tiled over M ("parallel")."""
    out = y_ref[...] * scale_ref[...] + shift_ref[...]
    if slope is not None:
        out = jnp.where(out >= 0, out, slope * out)
    o_ref[...] = out


def pallas_conv_bn_act(w_bf16, colsT_bf16, gamma, beta, slope, block_n=512):
    """(Cout, Kp) @ (Kp, M) -> BN (batch stats) -> act, all lane-dense on M."""
    cout, kp = w_bf16.shape
    _, m = colsT_bf16.shape
    if m % 128 == 0:
        tn = min(block_n, m)
    else:
        tn = m                       # full-extent lane block (allowed for ragged M)
    n_m = pl.cdiv(m, tn)
    gamma2 = gamma.reshape(cout, 1).astype(jnp.float32)
    beta2 = beta.reshape(cout, 1).astype(jnp.float32)

    y, scale, shift = pl.pallas_call(
        functools.partial(_conv_stats_kernel, m_total=m, eps=EPS),
        out_shape=(jax.ShapeDtypeStruct((cout, m), jnp.float32),
                   jax.ShapeDtypeStruct((cout, 1), jnp.float32),
                   jax.ShapeDtypeStruct((cout, 1), jnp.float32)),
        grid=(n_m,),
        in_specs=[pl.BlockSpec((cout, kp), lambda i: (0, 0)),     # resident weights
                  pl.BlockSpec((kp, tn), lambda i: (0, i)),       # im2col tile
                  pl.BlockSpec((cout, 1), lambda i: (0, 0)),
                  pl.BlockSpec((cout, 1), lambda i: (0, 0))],
        out_specs=(pl.BlockSpec((cout, tn), lambda i: (0, i)),
                   pl.BlockSpec((cout, 1), lambda i: (0, 0)),
                   pl.BlockSpec((cout, 1), lambda i: (0, 0))),
        scratch_shapes=[pltpu.VMEM((cout, 1), jnp.float32),
                        pltpu.VMEM((cout, 1), jnp.float32)],
        compiler_params=pltpu.CompilerParams(dimension_semantics=("arbitrary",)),
    )(w_bf16, colsT_bf16, gamma2, beta2)

    return pl.pallas_call(
        functools.partial(_bn_act_kernel, slope=slope),
        out_shape=jax.ShapeDtypeStruct((cout, m), jnp.float32),
        grid=(n_m,),
        in_specs=[pl.BlockSpec((cout, tn), lambda i: (0, i)),
                  pl.BlockSpec((cout, 1), lambda i: (0, 0)),
                  pl.BlockSpec((cout, 1), lambda i: (0, 0))],
        out_specs=pl.BlockSpec((cout, tn), lambda i: (0, i)),
        compiler_params=pltpu.CompilerParams(dimension_semantics=("parallel",)),
    )(y, scale, shift)


# ----------------------------- ConvLSTM recurrence (single scan kernel) -----------------------------

def _convlstm_scan_kernel(x_ref, w_ref, gamma_ref, beta_ref, mask_ref,
                          hy_ref, hx_s, cx_s, *, F, K, pad, W, t_inner, eps):
    """One grid step = t_inner timesteps.  hx/cx live in VMEM scratch across the scan.

    The whole gate conv (x-taps and h-taps) happens in-kernel: lane rolls (XLU) plus a
    precomputed tap-validity mask, then one bf16 MXU matmul per timestep.
    """
    t0 = pl.program_id(0)

    @pl.when(t0 == 0)
    def _():
        hx_s[...] = jnp.zeros_like(hx_s)
        cx_s[...] = jnp.zeros_like(cx_s)

    hx = hx_s[...]                                   # (F, M) f32, lanes ordered (b, h, w)
    cx = cx_s[...]
    w_all = w_ref[...]                               # (4F, K*K*(C+F)) bf16, resident
    gamma = gamma_ref[...]
    beta = beta_ref[...]
    mask = mask_ref[...]                             # (K*K, M) f32 {0,1}, loop-invariant
    kk_off = [((kh - pad) * W + (kw - pad)) for kh in range(K) for kw in range(K)]
    m_lanes = hx.shape[1]

    def taps_of(a):
        # TODO(synk): for large F*M, cast each tap to bf16 as produced (or stage into a
        # bf16 VMEM scratch) to halve live vreg bytes; kept f32-concat-then-cast here.
        out = []
        for kk, off in enumerate(kk_off):
            s = a if off == 0 else pltpu.roll(a, (-off) % m_lanes, 1)
            out.append(s * mask[kk:kk + 1, :])
        return out

    for ti in range(t_inner):
        x_t = x_ref[ti]                              # (C, M) f32
        cols = jnp.concatenate(taps_of(x_t) + taps_of(hx), axis=0).astype(jnp.bfloat16)
        g = jnp.dot(w_all, cols, preferred_element_type=jnp.float32)     # (4F, M) f32

        # BatchNorm2d (training-mode batch stats, per timestep) over (B, H, W) = lanes.
        mean = jnp.mean(g, axis=1, keepdims=True)
        var = jnp.mean((g - mean) ** 2, axis=1, keepdims=True)
        gn = (g - mean) * lax.rsqrt(var + eps) * gamma + beta

        # Gates are contiguous sublane blocks of height F (no lane slicing).
        ingate = jax.nn.sigmoid(gn[0 * F:1 * F])
        forgetgate = jax.nn.sigmoid(gn[1 * F:2 * F])
        cellgate = gn[2 * F:3 * F]
        outgate = jax.nn.sigmoid(gn[3 * F:4 * F])

        cx = forgetgate * cx + ingate * cellgate
        hx = outgate * jnp.tanh(cx)
        hy_ref[ti] = hx                              # lane-dense (F, M) store

    hx_s[...] = hx
    cx_s[...] = cx


def pallas_convlstm_scan(x_scan, w_full_bf16, gamma, beta, mask,
                         *, F, K, pad, W, t_inner):
    S, C, M = x_scan.shape
    G = 4 * F
    Kc = w_full_bf16.shape[1]
    kern = functools.partial(_convlstm_scan_kernel,
                             F=F, K=K, pad=pad, W=W, t_inner=t_inner, eps=EPS)
    return pl.pallas_call(
        kern,
        out_shape=jax.ShapeDtypeStruct((S, F, M), jnp.float32),
        grid=(S // t_inner,),
        in_specs=[pl.BlockSpec((t_inner, C, M), lambda t: (t, 0, 0)),   # x block
                  pl.BlockSpec((G, Kc), lambda t: (0, 0)),              # resident W
                  pl.BlockSpec((G, 1), lambda t: (0, 0)),               # resident gamma
                  pl.BlockSpec((G, 1), lambda t: (0, 0)),               # resident beta
                  pl.BlockSpec((K * K, M), lambda t: (0, 0))],          # resident tap mask
        out_specs=pl.BlockSpec((t_inner, F, M), lambda t: (t, 0, 0)),
        scratch_shapes=[pltpu.VMEM((F, M), jnp.float32),                # hx carry
                        pltpu.VMEM((F, M), jnp.float32)],               # cx carry
        compiler_params=pltpu.CompilerParams(dimension_semantics=("arbitrary",)),
    )(x_scan, w_full_bf16, gamma.reshape(G, 1), beta.reshape(G, 1), mask)


# ----------------------------- JAX glue -----------------------------

def im2col(x, ksize, padding, stride):
    """x: (N, C, H, W) -> (N*Ho*Wo, C*K*K), columns ordered (C, kh, kw)."""
    N, C, H, W = x.shape
    xp = jnp.pad(x, ((0, 0), (0, 0), (padding, padding), (padding, padding)))
    Hp, Wp = H + 2 * padding, W + 2 * padding
    Ho = (Hp - ksize) // stride + 1
    Wo = (Wp - ksize) // stride + 1
    patches = []
    for kh in range(ksize):
        for kw in range(ksize):
            patches.append(xp[:, :, kh:kh + stride * Ho:stride, kw:kw + stride * Wo:stride])
    p = jnp.stack(patches, axis=2)            # (N, C, K*K, Ho, Wo)
    p = p.transpose(0, 3, 4, 1, 2)            # (N, Ho, Wo, C, K*K)
    return p.reshape(N * Ho * Wo, C * ksize * ksize), Ho, Wo


def im2col_t(x, ksize, padding, stride):
    """x: (N, C, H, W) -> (C*K*K, N*Ho*Wo): transposed im2col, rows ordered (C, kh, kw)."""
    N, C, H, W = x.shape
    xp = jnp.pad(x, ((0, 0), (0, 0), (padding, padding), (padding, padding)))
    Hp, Wp = H + 2 * padding, W + 2 * padding
    Ho = (Hp - ksize) // stride + 1
    Wo = (Wp - ksize) // stride + 1
    patches = []
    for kh in range(ksize):
        for kw in range(ksize):
            patches.append(xp[:, :, kh:kh + stride * Ho:stride, kw:kw + stride * Wo:stride])
    p = jnp.stack(patches, axis=2)            # (N, C, K*K, Ho, Wo)
    p = p.transpose(1, 2, 0, 3, 4)            # (C, K*K, N, Ho, Wo)
    return p.reshape(C * ksize * ksize, N * Ho * Wo), Ho, Wo


def make_tap_mask(B, H, W, K, pad):
    """(K*K, B*H*W) f32 {0,1} validity mask for the in-kernel roll-based im2col."""
    l = jnp.arange(B * H * W, dtype=jnp.int32)
    h = (l % (H * W)) // W
    w = l % W
    rows = []
    for kh in range(K):
        for kw in range(K):
            dh, dw = kh - pad, kw - pad
            rows.append((h + dh >= 0) & (h + dh < H) & (w + dw >= 0) & (w + dw < W))
    return jnp.stack(rows, axis=0).astype(jnp.float32)


def _pick_t_inner(S, cap=8):
    for t in range(min(S, cap), 0, -1):
        if S % t == 0:
            return t
    return 1


def conv2d_bn_act(x_nchw, w, gamma, beta, padding, stride, slope, use_pallas=True):
    """Conv2d(bias=False) + BatchNorm2d + (Leaky)ReLU.  w: (Cout, Cin, K, K)."""
    N = x_nchw.shape[0]
    Cout, Cin, K, _ = w.shape
    Kred = Cin * K * K
    wmat = w.reshape(Cout, Kred)
    if use_pallas:
        # TODO(synk): move the stride>1 im2col in-kernel; roll-based in-kernel im2col
        # only applies to stride-1 shape-preserving convs (used for the ConvLSTM path).
        colsT, Ho, Wo = im2col_t(x_nchw, K, padding, stride)          # (Kred, M) f32
        Kp = _round_up(Kred, 16)                                      # bf16 sublane tile
        colsT = jnp.pad(colsT.astype(jnp.bfloat16), ((0, Kp - Kred), (0, 0)))
        wp = jnp.pad(wmat.astype(jnp.bfloat16), ((0, 0), (0, Kp - Kred)))
        out_t = pallas_conv_bn_act(wp, colsT, gamma, beta, slope)     # (Cout, M) f32
    else:  # pure-JAX reference (same bf16 MXU-operand rounding; f32 elsewhere)
        cols, Ho, Wo = im2col(x_nchw, K, padding, stride)
        y = jnp.dot(cols.astype(jnp.bfloat16), wmat.T.astype(jnp.bfloat16),
                    preferred_element_type=jnp.float32)
        mean = jnp.mean(y, axis=0, keepdims=True)
        var = jnp.mean((y - mean) ** 2, axis=0, keepdims=True)
        out = (y - mean) * lax.rsqrt(var + EPS) * gamma.reshape(1, -1) + beta.reshape(1, -1)
        if slope is not None:
            out = jnp.where(out >= 0, out, slope * out)
        out_t = out.T
    return out_t.reshape(Cout, N, Ho, Wo).transpose(1, 0, 2, 3)


def convlstm_block(x, w, gamma, beta, feat, padding, stride, use_pallas=True):
    """x: (B, S, C, H, W); w: (4F, C+F, K, K).  Returns (B, S, F, H, W)."""
    B, S, C, H, W = x.shape
    K = w.shape[2]
    G = 4 * feat
    if use_pallas:
        assert stride == 1 and (H + 2 * padding - K) // stride + 1 == H \
            and (W + 2 * padding - K) // stride + 1 == W, \
            "ConvLSTM requires a shape-preserving conv"
        M = B * H * W
        # (B,S,C,H,W) -> (S, C, B*H*W): per-timestep lane-dense (b,h,w) layout.
        x_scan = x.transpose(1, 2, 0, 3, 4).reshape(S, C, M)
        # Weight columns reordered to (kh, kw, channel): x-part then h-part, matching
        # the in-kernel tap ordering.
        w_x = w[:, :C].transpose(0, 2, 3, 1).reshape(G, K * K * C)
        w_h = w[:, C:].transpose(0, 2, 3, 1).reshape(G, K * K * feat)
        w_full = jnp.concatenate([w_x, w_h], axis=1).astype(jnp.bfloat16)
        mask = make_tap_mask(B, H, W, K, padding)                     # (K*K, M)
        t_inner = _pick_t_inner(S)
        hy_all = pallas_convlstm_scan(x_scan, w_full, gamma, beta, mask,
                                      F=feat, K=K, pad=padding, W=W, t_inner=t_inner)
        # TODO(synk): keep the internal (S, F, B*H*W) layout when chaining stacked
        # ConvLSTM layers to skip this transpose; needed here for the module output.
        return hy_all.reshape(S, feat, B, H, W).transpose(2, 0, 1, 3, 4)

    # pure-JAX reference path (matches PyTorch forward, bf16 matmul operands)
    wmat = w.reshape(G, (C + feat) * K * K).T.astype(jnp.bfloat16)
    hx = jnp.zeros((B, feat, H, W), jnp.float32)
    cx = jnp.zeros((B * H * W, feat), jnp.float32)       # rows ordered (B, H, W)
    outs = []
    for t in range(S):
        combined = jnp.concatenate([x[:, t], hx], axis=1)             # (B, C+F, H, W)
        cols, Ho, Wo = im2col(combined, K, padding, stride)
        g = jnp.dot(cols.astype(jnp.bfloat16), wmat, preferred_element_type=jnp.float32)
        mean = jnp.mean(g, axis=0, keepdims=True)
        var = jnp.mean((g - mean) ** 2, axis=0, keepdims=True)
        gn = (g - mean) * lax.rsqrt(var + EPS) * gamma.reshape(1, -1) + beta.reshape(1, -1)
        ingate = jax.nn.sigmoid(gn[:, :feat])
        forgetgate = jax.nn.sigmoid(gn[:, feat:2 * feat])
        cellgate = gn[:, 2 * feat:3 * feat]
        outgate = jax.nn.sigmoid(gn[:, 3 * feat:])
        cy = forgetgate * cx + ingate * cellgate
        hy = outgate * jnp.tanh(cy)
        cx = cy
        hx = hy.reshape(B, Ho, Wo, feat).transpose(0, 3, 1, 2)        # back to NCHW
        outs.append(hx)
    return jnp.stack(outs, axis=1)      # == torch.stack(outputs).permute(1,0,2,3,4)


def make_encoder_params(config, key):
    layers = []
    for spec in config:
        type_, act, in_ch, out_ch, ksize, pad, stride = spec
        key, kw, kg, kb = jax.random.split(key, 4)
        cout = out_ch if type_ == 'conv' else 4 * out_ch
        cin = in_ch if type_ == 'conv' else in_ch + out_ch
        w = (0.1 * jax.random.normal(kw, (cout, cin, ksize, ksize))).astype(jnp.float32)
        gamma = (1.0 + 0.1 * jax.random.normal(kg, (cout,))).astype(jnp.float32)
        beta = (0.1 * jax.random.normal(kb, (cout,))).astype(jnp.float32)
        layers.append((spec, {'w': w, 'gamma': gamma, 'beta': beta}))
    return layers


def encoder_forward(x, layers, use_pallas=True):
    outputs = [x]
    for spec, p in layers:
        type_, act, in_ch, out_ch, ksize, pad, stride = spec
        if type_ == 'conv':
            B, S, C, H, W = x.shape
            slope = 0.01 if act == 'leaky' else (0.0 if act == 'relu' else None)
            y = conv2d_bn_act(x.reshape(B * S, C, H, W), p['w'], p['gamma'],
                              p['beta'], pad, stride, slope, use_pallas)
            x = y.reshape(B, S, y.shape[1], y.shape[2], y.shape[3])
        elif type_ == 'convlstm':
            x = convlstm_block(x, p['w'], p['gamma'], p['beta'], out_ch,
                               pad, stride, use_pallas)
            outputs.append(x)
    return outputs


# ----------------------------- main -----------------------------

if __name__ == "__main__":
    key = jax.random.PRNGKey(0)
    kx, kp = jax.random.split(key)

    # Input (B, S, C, H, W)
    B, S, C, H, W = 2, 4, 4, 16, 16
    x = jax.random.normal(kx, (B, S, C, H, W), jnp.float32)

    # Small synthetic config.encoder: (type, activation, in_ch, out_ch, k, pad, stride)
    config = [
        ('conv', 'leaky', 4, 8, 3, 1, 2),     # (B,S,4,16,16) -> (B,S,8,8,8)
        ('convlstm', '', 8, 8, 3, 1, 1),      # (B,S,8,8,8)   -> (B,S,8,8,8)
    ]
    layers = make_encoder_params(config, kp)

    outs = encoder_forward(x, layers, use_pallas=True)
    outs = [jax.block_until_ready(o) for o in outs]

    # Correctness check against the pure-JAX reference path (same bf16 MXU-operand
    # rounding, f32 elementwise math).
    refs = encoder_forward(x, layers, use_pallas=False)
    for o, r in zip(outs, refs):
        assert o.shape == r.shape, (o.shape, r.shape)
        assert float(jnp.max(jnp.abs(o - r))) < 5e-3, "Pallas result mismatch vs reference"

    print("KERNEL_OK")
</pallas_src>

<mosaic_0001>
module attributes {stable_mosaic.version = 11 : i64} {
  func.func @_conv_stats_kernel(%arg0: i32, %arg1: memref<8x48xbf16, #tpu.memory_space<vmem>>, %arg2: memref<48x512xbf16, #tpu.memory_space<vmem>>, %arg3: memref<8x1xf32, #tpu.memory_space<vmem>>, %arg4: memref<8x1xf32, #tpu.memory_space<vmem>>, %arg5: memref<8x512xf32, #tpu.memory_space<vmem>>, %arg6: memref<8x1xf32, #tpu.memory_space<vmem>>, %arg7: memref<8x1xf32, #tpu.memory_space<vmem>>, %arg8: memref<8x1xf32, #tpu.memory_space<vmem>>, %arg9: memref<8x1xf32, #tpu.memory_space<vmem>>) attributes {dimension_semantics = [#tpu.dimension_semantics<arbitrary>], iteration_bounds = array<i64: 1>, scalar_prefetch = 0 : i64, scratch_operands = 2 : i64, tpu.core_type = #tpu.core_type<tc>, window_params = [{pipeline_mode = #tpu.pipeline_mode<synchronous>, transform_indices = @transform_0, window_bounds = array<i64: 8, 48>}, {transform_indices = @transform_1, window_bounds = array<i64: 48, 512>}, {pipeline_mode = #tpu.pipeline_mode<synchronous>, transform_indices = @transform_2, window_bounds = array<i64: 8, 1>}, {pipeline_mode = #tpu.pipeline_mode<synchronous>, transform_indices = @transform_3, window_bounds = array<i64: 8, 1>}, {transform_indices = @transform_4, window_bounds = array<i64: 8, 512>}, {pipeline_mode = #tpu.pipeline_mode<synchronous>, transform_indices = @transform_5, window_bounds = array<i64: 8, 1>}, {pipeline_mode = #tpu.pipeline_mode<synchronous>, transform_indices = @transform_6, window_bounds = array<i64: 8, 1>}]} {
    %c0_i32 = arith.constant 0 : i32
    %0 = arith.cmpi eq, %arg0, %c0_i32 : i32
    %1 = arith.extui %0 : i1 to i32
    %c0_i32_0 = arith.constant 0 : i32
    %2 = arith.cmpi ne, %1, %c0_i32_0 : i32
    scf.if %2 {
      %cst_20 = arith.constant 0.000000e+00 : f32
      %31 = vector.broadcast %cst_20 : f32 to vector<8x1xf32>
      %c0_21 = arith.constant 0 : index
      %c0_22 = arith.constant 0 : index
      %32 = vector.load %arg8[%c0_21, %c0_22] : memref<8x1xf32, #tpu.memory_space<vmem>>, vector<8x1xf32>
      tpu.vector_store %arg8[%c0_21, %c0_22], %31 {strides = array<i32>} : memref<8x1xf32, #tpu.memory_space<vmem>>, vector<8x1xf32>,
      %cst_23 = arith.constant 0.000000e+00 : f32
      %33 = vector.broadcast %cst_23 : f32 to vector<8x1xf32>
      %c0_24 = arith.constant 0 : index
      %c0_25 = arith.constant 0 : index
      %34 = vector.load %arg9[%c0_24, %c0_25] : memref<8x1xf32, #tpu.memory_space<vmem>>, vector<8x1xf32>
      tpu.vector_store %arg9[%c0_24, %c0_25], %33 {strides = array<i32>} : memref<8x1xf32, #tpu.memory_space<vmem>>, vector<8x1xf32>,
    } else {
    }
    %c0 = arith.constant 0 : index
    %c0_1 = arith.constant 0 : index
    %3 = vector.load %arg1[%c0, %c0_1] : memref<8x48xbf16, #tpu.memory_space<vmem>>, vector<8x48xbf16>
    %c0_2 = arith.constant 0 : index
    %c0_3 = arith.constant 0 : index
    %4 = vector.load %arg2[%c0_2, %c0_3] : memref<48x512xbf16, #tpu.memory_space<vmem>>, vector<48x512xbf16>
    %cst = arith.constant dense<0.000000e+00> : vector<8x512xf32>
    %5 = tpu.matmul %3, %4, %cst {dimension_numbers = #tpu.dot_dimension_numbers<[1], [0], [0], [1], [0, 0, 1, 1], [], []>} : vector<8x48xbf16>, vector<48x512xbf16>, vector<8x512xf32> -> vector<8x512xf32>
    %c0_4 = arith.constant 0 : index
    %c0_5 = arith.constant 0 : index
    %6 = vector.load %arg5[%c0_4, %c0_5] : memref<8x512xf32, #tpu.memory_space<vmem>>, vector<8x512xf32>
    tpu.vector_store %arg5[%c0_4, %c0_5], %5 {strides = array<i32>} : memref<8x512xf32, #tpu.memory_space<vmem>>, vector<8x512xf32>,
    %7 = tpu.iota {dimensions = array<i32: 1>} : vector<1x512xi32>
    %c512_i32 = arith.constant 512 : i32
    %8 = arith.muli %arg0, %c512_i32 : i32
    %9 = vector.broadcast %8 : i32 to vector<1x512xi32>
    %10 = arith.addi %7, %9 : vector<1x512xi32>
    %c512_i32_6 = arith.constant 512 : i32
    %11 = vector.broadcast %c512_i32_6 : i32 to vector<1x512xi32>
    %12 = arith.cmpi slt, %10, %11 : vector<1x512xi32>
    %cst_7 = arith.constant 0.000000e+00 : f32
    %13 = vector.shape_cast %12 : vector<1x512xi1> to vector<1x512xi1>
    %14 = vector.broadcast %13 : vector<1x512xi1> to vector<8x512xi1>
    %15 = vector.broadcast %cst_7 : f32 to vector<8x512xf32>
    %16 = arith.select %14, %5, %15 : vector<8x512xi1>, vector<8x512xf32>
    %c0_8 = arith.constant 0 : index
    %c0_9 = arith.constant 0 : index
    %17 = vector.load %arg8[%c0_8, %c0_9] : memref<8x1xf32, #tpu.memory_space<vmem>>, vector<8x1xf32>
    %cst_10 = arith.constant dense<0.000000e+00> : vector<8xf32>
    %18 = vector.multi_reduction <add>, %16, %cst_10 [1] : vector<8x512xf32> to vector<8xf32>
    %19 = vector.shape_cast %18 : vector<8xf32> to vector<8x1xf32>
    %20 = arith.addf %17, %19 : vector<8x1xf32>
    %c0_11 = arith.constant 0 : index
    %c0_12 = arith.constant 0 : index
    %21 = vector.load %arg8[%c0_11, %c0_12] : memref<8x1xf32, #tpu.memory_space<vmem>>, vector<8x1xf32>
    tpu.vector_store %arg8[%c0_11, %c0_12], %20 {strides = array<i32>} : memref<8x1xf32, #tpu.memory_space<vmem>>, vector<8x1xf32>,
    %c0_13 = arith.constant 0 : index
    %c0_14 = arith.constant 0 : index
    %22 = vector.load %arg9[%c0_13, %c0_14] : memref<8x1xf32, #tpu.memory_space<vmem>>, vector<8x1xf32>
    %23 = arith.mulf %16, %16 : vector<8x512xf32>
    %cst_15 = arith.constant dense<0.000000e+00> : vector<8xf32>
    %24 = vector.multi_reduction <add>, %23, %cst_15 [1] : vector<8x512xf32> to vector<8xf32>
    %25 = vector.shape_cast %24 : vector<8xf32> to vector<8x1xf32>
    %26 = arith.addf %22, %25 : vector<8x1xf32>
    %c0_16 = arith.constant 0 : index
    %c0_17 = arith.constant 0 : index
    %27 = vector.load %arg9[%c0_16, %c0_17] : memref<8x1xf32, #tpu.memory_space<vmem>>, vector<8x1xf32>
    tpu.vector_store %arg9[%c0_16, %c0_17], %26 {strides = array<i32>} : memref<8x1xf32, #tpu.memory_space<vmem>>, vector<8x1xf32>,
    %c0_i32_18 = arith.constant 0 : i32
    %28 = arith.cmpi eq, %arg0, %c0_i32_18 : i32
    %29 = arith.extui %28 : i1 to i32
    %c0_i32_19 = arith.constant 0 : i32
    %30 = arith.cmpi ne, %29, %c0_i32_19 : i32
    scf.if %30 {
      %c0_20 = arith.constant 0 : index
      %c0_21 = arith.constant 0 : index
      %31 = vector.load %arg8[%c0_20, %c0_21] : memref<8x1xf32, #tpu.memory_space<vmem>>, vector<8x1xf32>
      %cst_22 = arith.constant 0.001953125 : f32
      %32 = vector.broadcast %cst_22 : f32 to vector<8x1xf32>
      %33 = arith.mulf %31, %32 : vector<8x1xf32>
      %c0_23 = arith.constant 0 : index
      %c0_24 = arith.constant 0 : index
      %34 = vector.load %arg9[%c0_23, %c0_24] : memref<8x1xf32, #tpu.memory_space<vmem>>, vector<8x1xf32>
      %cst_25 = arith.constant 0.001953125 : f32
      %35 = vector.broadcast %cst_25 : f32 to vector<8x1xf32>
      %36 = arith.mulf %34, %35 : vector<8x1xf32>
      %37 = arith.mulf %33, %33 : vector<8x1xf32>
      %38 = arith.subf %36, %37 : vector<8x1xf32>
      %cst_26 = arith.constant 0.000000e+00 : f32
      %39 = vector.broadcast %cst_26 : f32 to vector<8x1xf32>
      %40 = arith.maximumf %38, %39 : vector<8x1xf32>
      %c0_27 = arith.constant 0 : index
      %c0_28 = arith.constant 0 : index
      %41 = vector.load %arg3[%c0_27, %c0_28] : memref<8x1xf32, #tpu.memory_space<vmem>>, vector<8x1xf32>
      %cst_29 = arith.constant 9.99999974E-6 : f32
      %42 = vector.broadcast %cst_29 : f32 to vector<8x1xf32>
      %43 = arith.addf %40, %42 : vector<8x1xf32>
      %44 = math.rsqrt %43 : vector<8x1xf32>
      %45 = arith.mulf %41, %44 : vector<8x1xf32>
      %c0_30 = arith.constant 0 : index
      %c0_31 = arith.constant 0 : index
      %46 = vector.load %arg6[%c0_30, %c0_31] : memref<8x1xf32, #tpu.memory_space<vmem>>, vector<8x1xf32>
      tpu.vector_store %arg6[%c0_30, %c0_31], %45 {strides = array<i32>} : memref<8x1xf32, #tpu.memory_space<vmem>>, vector<8x1xf32>,
      %c0_32 = arith.constant 0 : index
      %c0_33 = arith.constant 0 : index
      %47 = vector.load %arg4[%c0_32, %c0_33] : memref<8x1xf32, #tpu.memory_space<vmem>>, vector<8x1xf32>
      %48 = arith.mulf %33, %45 : vector<8x1xf32>
      %49 = arith.subf %47, %48 : vector<8x1xf32>
      %c0_34 = arith.constant 0 : index
      %c0_35 = arith.constant 0 : index
      %50 = vector.load %arg7[%c0_34, %c0_35] : memref<8x1xf32, #tpu.memory_space<vmem>>, vector<8x1xf32>
      tpu.vector_store %arg7[%c0_34, %c0_35], %49 {strides = array<i32>} : memref<8x1xf32, #tpu.memory_space<vmem>>, vector<8x1xf32>,
    } else {
    }
    return
  }
  func.func @transform_0(%arg0: i32) -> (i32, i32) {
    %c0_i32 = arith.constant 0 : i32
    %c0_i32_0 = arith.constant 0 : i32
    %c0_i32_1 = arith.constant 0 : i32
    return %c0_i32, %c0_i32_0 : i32, i32
  }
  func.func @transform_1(%arg0: i32) -> (i32, i32) {
    %c0_i32 = arith.constant 0 : i32
    %c0_i32_0 = arith.constant 0 : i32
    return %c0_i32, %arg0 : i32, i32
  }
  func.func @transform_2(%arg0: i32) -> (i32, i32) {
    %c0_i32 = arith.constant 0 : i32
    %c0_i32_0 = arith.constant 0 : i32
    %c0_i32_1 = arith.constant 0 : i32
    return %c0_i32, %c0_i32_0 : i32, i32
  }
  func.func @transform_3(%arg0: i32) -> (i32, i32) {
    %c0_i32 = arith.constant 0 : i32
    %c0_i32_0 = arith.constant 0 : i32
    %c0_i32_1 = arith.constant 0 : i32
    return %c0_i32, %c0_i32_0 : i32, i32
  }
  func.func @transform_4(%arg0: i32) -> (i32, i32) {
    %c0_i32 = arith.constant 0 : i32
    %c0_i32_0 = arith.constant 0 : i32
    return %c0_i32, %arg0 : i32, i32
  }
  func.func @transform_5(%arg0: i32) -> (i32, i32) {
    %c0_i32 = arith.constant 0 : i32
    %c0_i32_0 = arith.constant 0 : i32
    %c0_i32_1 = arith.constant 0 : i32
    return %c0_i32, %c0_i32_0 : i32, i32
  }
  func.func @transform_6(%arg0: i32) -> (i32, i32) {
    %c0_i32 = arith.constant 0 : i32
    %c0_i32_0 = arith.constant 0 : i32
    %c0_i32_1 = arith.constant 0 : i32
    return %c0_i32, %c0_i32_0 : i32, i32
  }
}

</mosaic_0001>

<llo_original>
// kernel: tpu_custom_call.1
$region0: #{tpu_custom_call.1}
  #allocation0 [shape = 'u32[]', space=smem, size = 0x4, offset = 0x4, fixed_abs, tag = 'smem constant byte address 0x4 - core index']
  #allocation1 [shape = 'u32[144,128]{1,0:T(1,128)}', space=vmem, size = 0x12000, scoped, tag = 'internal scratch']
  #allocation2 [shape = 'f32[8,1]{1,0:T(8,128)}', space=vmem, size = 0x1000, scoped, tag = 'scratch operand']
  #allocation3 [shape = 'f32[8,1]{1,0:T(8,128)}', space=vmem, size = 0x1000, scoped, tag = 'scratch operand']
  %s0 = inlined_call_operand.vmem [shape: bf16[8,48], index: 0, kind: input, shape index: {}]
  %s1 = inlined_call_operand.hbm [shape: bf16[48,512], index: 1, kind: input, shape index: {}]
  %s2 = inlined_call_operand.vmem [shape: f32[8,1], index: 2, kind: input, shape index: {}]
  %s3 = inlined_call_operand.vmem [shape: f32[8,1], index: 3, kind: input, shape index: {}]
  %s4 = inlined_call_operand.hbm [shape: f32[8,512], index: 4, kind: output, shape index: {0}]
  %s5 = inlined_call_operand.vmem [shape: f32[8,1], index: 5, kind: output, shape index: {1}]
  %s6 = inlined_call_operand.vmem [shape: f32[8,1], index: 6, kind: output, shape index: {2}]
  %7 = xla_tuple %s4, %s5, %s6
  %s8 = sld [smem:[#allocation0]]
  $region54: #{tpu_custom_call.1} parent=0
    _
  %s10 = ssub.s32 1, %s8
  %s11 = scalar_select 0, %s10, %s8
  $region1: #{tpu_custom_call.1} parent=0
    #allocation4 [shape = 'u8[49152]{0}', space=vmem, size = 0xc000, scoped, tag = 'input window, operand 1, single buffered']
    #allocation5 [shape = 's32[1]{0}', space=sflag, size = 0x4, scoped, tag = 'scoped memory for tpu_custom_call.1']
    #allocation6 [shape = 's32[1]{0}', space=sflag, size = 0x4, scoped, tag = 'scoped memory for tpu_custom_call.1']
    #allocation7 [shape = 'u8[16384]{0}', space=vmem, size = 0x4000, scoped, tag = 'output window, operand 0, single buffered']
    %12 = vsyncpa [#allocation5], 0
    %13 = vsyncpa [#allocation6], 0
    // Predicated region
    $region2: #{tpu_custom_call.1} parent=1 // pred_check
      _
    $region3: #{tpu_custom_call.1} parent=1 // pred_check_branch
      %15 = sbr.rel (0) target = $region5
    $region4: #{tpu_custom_call.1} parent=1 // pred_region
      _
    $region5: #{tpu_custom_call.1} parent=1 // pred_fallthru
      _
    // Predicated region
    $region6: #{tpu_custom_call.1} parent=1 // pred_check
      _
    $region7: #{tpu_custom_call.1} parent=1 // pred_check_branch
      %17 = sbr.rel (0) target = $region9
    $region8: #{tpu_custom_call.1} parent=1 // pred_region
      %s19 = ssub.s32 1536, 1536
      %20 = vsyncadd [#allocation5], %s19
      %s21 = sshll.u32 [#allocation4], 4
      %s22 = int_to_ptr.vmem [resolvable:$true] %s21
      %27 = dma.hbm_to_vmem [thread:$0]  %s1, 1536, %s22, [#allocation5], 256, 256, 16
    $region9: #{tpu_custom_call.1} parent=1 // pred_fallthru
      _
    // Predicated region
    $region10: #{tpu_custom_call.1} parent=1 // pred_check
      _
    $region11: #{tpu_custom_call.1} parent=1 // pred_check_branch
      %29 = sbr.rel (0) target = $region13
    $region12: #{tpu_custom_call.1} parent=1 // pred_region
      _
    $region13: #{tpu_custom_call.1} parent=1 // pred_fallthru
      _
    // Predicated region
    $region14: #{tpu_custom_call.1} parent=1 // pred_check
      _
    $region15: #{tpu_custom_call.1} parent=1 // pred_check_branch
      %31 = sbr.rel (0) target = $region17
    $region16: #{tpu_custom_call.1} parent=1 // pred_region
      _
    $region17: #{tpu_custom_call.1} parent=1 // pred_fallthru
      _
    // Predicated region
    $region18: #{tpu_custom_call.1} parent=1 // pred_check
      _
    $region19: #{tpu_custom_call.1} parent=1 // pred_check_branch
      %33 = sbr.rel (0) target = $region21
    $region20: #{tpu_custom_call.1} parent=1 // pred_region
      %34 = dma.done [#allocation5], 1536
    $region21: #{tpu_custom_call.1} parent=1 // pred_fallthru
      _
    %p36 = scmp.eq.s32.totalorder 0, 0
    // Predicated region
    $region22: #{tpu_custom_call.1} parent=1 // pred_check
      %p37 = pneg %p36
    $region23: #{tpu_custom_call.1} parent=1 // pred_check_branch
      %39 = sbr.rel (%p37) target = $region25
    $region24: #{tpu_custom_call.1} parent=1 // pred_region
      %vm40 = vcmask 7168
      %41 = vst.msk [vmem:[#allocation2] sm:$0xff] %vm40, 0.0
      %42 = vst.msk [vmem:[#allocation3] sm:$0xff] %vm40, 0.0
    $region25: #{tpu_custom_call.1} parent=1 // pred_fallthru
      _
    %v43 = vld [vmem:[%s0] sm:$0xf]
    %v44 = vld [vmem:[#allocation4] sm:$0xff]
    %v45 = vld [vmem:[#allocation4 + $0x8] sm:$0xff]
    %v46 = vld [vmem:[#allocation4 + $0x10] sm:$0xff]
    %v47 = vld [vmem:[#allocation4 + $0x18] sm:$0xff]
    %v48 = vld [vmem:[#allocation4 + $0x20] sm:$0xff]
    %v49 = vld [vmem:[#allocation4 + $0x28] sm:$0xff]
    %v50 = vld [vmem:[#allocation4 + $0x30] sm:$0xff]
    %v51 = vld [vmem:[#allocation4 + $0x38] sm:$0xff]
    %v52 = vld [vmem:[#allocation4 + $0x40] sm:$0xff]
    %v53 = vld [vmem:[#allocation4 + $0x48] sm:$0xff]
    %v54 = vld [vmem:[#allocation4 + $0x50] sm:$0xff]
    %v55 = vld [vmem:[#allocation4 + $0x58] sm:$0xff]
    %v68 = vunpack.c.l.b16 %v44
    %v69 = vunpack.c.h.b16 %v44
    %v70 = vunpack.c.l.b16 %v45
    %v71 = vunpack.c.h.b16 %v45
    %v72 = vunpack.c.l.b16 %v46
    %v73 = vunpack.c.h.b16 %v46
    %v74 = vunpack.c.l.b16 %v47
    %v75 = vunpack.c.h.b16 %v47
    %v76 = vunpack.c.l.b16 %v48
    %v77 = vunpack.c.h.b16 %v48
    %v78 = vunpack.c.l.b16 %v49
    %v79 = vunpack.c.h.b16 %v49
    %v80 = vunpack.c.l.b16 %v50
    %v81 = vunpack.c.h.b16 %v50
    %v82 = vunpack.c.l.b16 %v51
    %v83 = vunpack.c.h.b16 %v51
    %v84 = vunpack.c.l.b16 %v52
    %v85 = vunpack.c.h.b16 %v52
    %v86 = vunpack.c.l.b16 %v53
    %v87 = vunpack.c.h.b16 %v53
    %v88 = vunpack.c.l.b16 %v54
    %v89 = vunpack.c.h.b16 %v54
    %v90 = vunpack.c.l.b16 %v55
    %v91 = vunpack.c.h.b16 %v55
    %v92 = vpack.c.b16 %v72, %v68
    %v93 = vpack.c.b16 %v73, %v69
    %v94 = vpack.c.b16 %v74, %v70
    %v95 = vpack.c.b16 %v75, %v71
    %v96 = vpack.c.b16 %v80, %v76
    %v97 = vpack.c.b16 %v81, %v77
    %v98 = vpack.c.b16 %v82, %v78
    %v99 = vpack.c.b16 %v83, %v79
    %v100 = vpack.c.b16 %v88, %v84
    %v101 = vpack.c.b16 %v89, %v85
    %v102 = vpack.c.b16 %v90, %v86
    %v103 = vpack.c.b16 %v91, %v87
    %vm116 = vcmask 392192
    %v118 = vsel %vm116, %v43, 0
    %120 = vmatprep.subr.bf16.mxu0 0
    %121 = vmatpush1.bf16.msra.mxu0 0
    %122 = vmatprep.subr.bf16.mxu0 0
    %123 = vmatpush1.bf16.msra.mxu0 0
    %124 = vmatprep.subr.bf16.mxu0 0
    %125 = vmatpush1.bf16.msra.mxu0 0
    %126 = vmatprep.subr.bf16.mxu0 0
    %127 = vmatpush1.bf16.msra.mxu0 0
    %128 = vmatprep.subr.bf16.mxu0 0
    %129 = vmatpush1.bf16.msra.mxu0 0
    %130 = vmatprep.subr.bf16.mxu0 %v101
    %131 = vmatpush1.bf16.msra.mxu0 %v100
    %132 = vmatprep.subr.bf16.mxu0 %v97
    %133 = vmatpush1.bf16.msra.mxu0 %v96
    %134 = vmatprep.subr.bf16.mxu0 %v93
    %135 = vmatpush1.bf16.msra.mxu0 %v92
    %136 = vmatprep.subr.bf16.mxu0 0
    %137 = vmatpush2.bf16.msra.mxu0 0
    %138 = vmatprep.subr.bf16.mxu0 0
    %139 = vmatpush2.bf16.msra.mxu0 0
    %140 = vmatprep.subr.bf16.mxu0 0
    %141 = vmatpush2.bf16.msra.mxu0 0
    %142 = vmatprep.subr.bf16.mxu0 0
    %143 = vmatpush2.bf16.msra.mxu0 0
    %144 = vmatprep.subr.bf16.mxu0 0
    %145 = vmatpush2.bf16.msra.mxu0 0
    %146 = vmatprep.subr.bf16.mxu0 0
    %147 = vmatpush2.bf16.msra.mxu0 0
    %148 = vmatprep.subr.bf16.mxu0 0
    %149 = vmatpush2.bf16.msra.mxu0 0
    %150 = vmatprep.subr.bf16.mxu0 0
    %151 = vmatpush2.bf16.msra.mxu0 0
    %152 = vmatprep.mubr.bf16.mxu0 0
    %153 = vmatmul.mubr.bf16.gmra.mxu0 %v118
    %v154 = vpop.f32.mrf.mxu0
    %v155 = vadd.f32 0.0, %v154
    %v156 = vpop.f32.mrf.mxu0
    %v157 = vadd.f32 0.0, %v156
    %v158 = vpop.f32.mrf.mxu0
    %v159 = vpop.f32.mrf.mxu0
    %160 = vdwg.mxu0
    %161 = vmatprep.subr.bf16.mxu0 0
    %162 = vmatpush1.bf16.msra.mxu0 0
    %163 = vmatprep.subr.bf16.mxu0 0
    %164 = vmatpush1.bf16.msra.mxu0 0
    %165 = vmatprep.subr.bf16.mxu0 0
    %166 = vmatpush1.bf16.msra.mxu0 0
    %167 = vmatprep.subr.bf16.mxu0 0
    %168 = vmatpush1.bf16.msra.mxu0 0
    %169 = vmatprep.subr.bf16.mxu0 0
    %170 = vmatpush1.bf16.msra.mxu0 0
    %171 = vmatprep.subr.bf16.mxu0 %v103
    %172 = vmatpush1.bf16.msra.mxu0 %v102
    %173 = vmatprep.subr.bf16.mxu0 %v99
    %174 = vmatpush1.bf16.msra.mxu0 %v98
    %175 = vmatprep.subr.bf16.mxu0 %v95
    %176 = vmatpush1.bf16.msra.mxu0 %v94
    %177 = vmatprep.subr.bf16.mxu0 0
    %178 = vmatpush2.bf16.msra.mxu0 0
    %179 = vmatprep.subr.bf16.mxu0 0
    %180 = vmatpush2.bf16.msra.mxu0 0
    %181 = vmatprep.subr.bf16.mxu0 0
    %182 = vmatpush2.bf16.msra.mxu0 0
    %183 = vmatprep.subr.bf16.mxu0 0
    %184 = vmatpush2.bf16.msra.mxu0 0
    %185 = vmatprep.subr.bf16.mxu0 0
    %186 = vmatpush2.bf16.msra.mxu0 0
    %187 = vmatprep.subr.bf16.mxu0 0
    %188 = vmatpush2.bf16.msra.mxu0 0
    %189 = vmatprep.subr.bf16.mxu0 0
    %190 = vmatpush2.bf16.msra.mxu0 0
    %191 = vmatprep.subr.bf16.mxu0 0
    %192 = vmatpush2.bf16.msra.mxu0 0
    %193 = vmatprep.mubr.bf16.mxu0 0
    %194 = vmatmul.mubr.bf16.gmra.mxu0 %v118
    %v195 = vpop.f32.mrf.mxu0
    %v196 = vadd.f32 0.0, %v195
    %v197 = vpop.f32.mrf.mxu0
    %v198 = vadd.f32 0.0, %v197
    %v199 = vpop.f32.mrf.mxu0
    %v200 = vpop.f32.mrf.mxu0
    %201 = vdwg.mxu0
    %202 = vst [vmem:[#allocation7] sm:$0xff] %v155
    %203 = vst [vmem:[#allocation7 + $0x8] sm:$0xff] %v157
    %204 = vst [vmem:[#allocation7 + $0x10] sm:$0xff] %v196
    %205 = vst [vmem:[#allocation7 + $0x18] sm:$0xff] %v198
    %v206 = vlaneseq
    %v207 = vand.u32 %v206, 127
    %v208 = vadd.s32 %v207, 128
    %v209 = vadd.s32 %v207, 256
    %v210 = vadd.s32 %v207, 384
    %s211 = smul.u32 0, 512
    %v212 = vstv %s211
    %v213 = vadd.s32 %v207, %v212
    %v214 = vadd.s32 %v208, %v212
    %v215 = vadd.s32 %v209, %v212
    %v216 = vadd.s32 %v210, %v212
    %vm217 = vcmp.lt.s32.totalorder %v213, 512
    %vm218 = vcmp.lt.s32.totalorder %v214, 512
    %vm219 = vcmp.lt.s32.totalorder %v215, 512
    %vm220 = vcmp.lt.s32.totalorder %v216, 512
    %v221 = vsel %vm217, 1, 0
    %v222 = vsel %vm218, 1, 0
    %v223 = vsel %vm219, 1, 0
    %v224 = vsel %vm220, 1, 0
    %vm225 = vcmp.eq.s32.totalorder %v221, 1
    %vm226 = vcmp.eq.s32.totalorder %v222, 1
    %vm227 = vcmp.eq.s32.totalorder %v223, 1
    %vm228 = vcmp.eq.s32.totalorder %v224, 1
    %v229 = vsel %vm225, %v155, 0.0
    %v230 = vsel %vm226, %v157, 0.0
    %v231 = vsel %vm227, %v196, 0.0
    %v232 = vsel %vm228, %v198, 0.0
    %v233 = vld [vmem:[#allocation2] sm:$0xff]
    %v234 = vadd.f32 %v229, %v230
    %v235 = vadd.f32 %v234, %v231
    %v236 = vadd.f32 %v235, %v232
    %237 = vadd.xlane.f32.xlu0 %v236
    %v238 = vpop.xlane.xlu0 %237
    %v239 = vadd.f32 %v233, %v238
    %vm240 = vcmask 7168
    %241 = vst.msk [vmem:[#allocation2] sm:$0xff] %vm240, %v239
    %v242 = vld [vmem:[#allocation3] sm:$0xff]
    %v243 = vmul.f32 %v229, %v229
    %v244 = vmul.f32 %v230, %v230
    %v245 = vmul.f32 %v231, %v231
    %v246 = vmul.f32 %v232, %v232
    %v247 = vadd.f32 %v243, %v244
    %v248 = vadd.f32 %v247, %v245
    %v249 = vadd.f32 %v248, %v246
    %250 = vadd.xlane.f32.xlu0 %v249
    %v251 = vpop.xlane.xlu0 %250
    %v252 = vadd.f32 %v242, %v251
    %253 = vst.msk [vmem:[#allocation3] sm:$0xff] %vm240, %v252
    // Predicated region
    $region26: #{tpu_custom_call.1} parent=1 // pred_check
      %p254 = pneg %p36
    $region27: #{tpu_custom_call.1} parent=1 // pred_check_branch
      %256 = sbr.rel (%p254) target = $region29
    $region28: #{tpu_custom_call.1} parent=1 // pred_region
      %v257 = vld [vmem:[#allocation2] sm:$0xff]
      %v258 = vmul.f32 %v257, 0.001953125
      %v259 = vld [vmem:[#allocation3] sm:$0xff]
      %v260 = vmul.f32 %v259, 0.001953125
      %v261 = vmul.f32 %v258, %v258
      %v262 = vsub.f32 %v260, %v261
      %v263 = vmax.f32 %v262, 0.0
      %v264 = vld [vmem:[%s2] sm:$0xff]
      %v265 = vadd.f32 %v263, 1e-05
      %v266 = vrsqrt.pop %v265
      %v267 = vmul.f32 %v264, %v266
      %268 = vst.msk [vmem:[%s5] sm:$0xff] %vm240, %v267
      %v269 = vld [vmem:[%s3] sm:$0xff]
      %v270 = vmul.f32 %v258, %v267
      %v271 = vsub.f32 %v269, %v270
      %272 = vst.msk [vmem:[%s6] sm:$0xff] %vm240, %v271
    $region29: #{tpu_custom_call.1} parent=1 // pred_fallthru
      _
    // Predicated region
    $region30: #{tpu_custom_call.1} parent=1 // pred_check
      _
    $region31: #{tpu_custom_call.1} parent=1 // pred_check_branch
      %274 = sbr.rel (0) target = $region33
    $region32: #{tpu_custom_call.1} parent=1 // pred_region
      %s276 = ssub.s32 512, 512
      %277 = vsyncadd [#allocation6], %s276
      %s279 = sshll.u32 [#allocation7], 4
      %s280 = int_to_ptr.vmem [resolvable:$true] %s279
      %282 = dma.vmem_to_hbm [thread:$0]  %s280, 512, %s4, [#allocation6]
    $region33: #{tpu_custom_call.1} parent=1 // pred_fallthru
      _
    // Predicated region
    $region34: #{tpu_custom_call.1} parent=1 // pred_check
      _
    $region35: #{tpu_custom_call.1} parent=1 // pred_check_branch
      %284 = sbr.rel (0) target = $region37
    $region36: #{tpu_custom_call.1} parent=1 // pred_region
      _
    $region37: #{tpu_custom_call.1} parent=1 // pred_fallthru
      _
    // Predicated region
    $region38: #{tpu_custom_call.1} parent=1 // pred_check
      _
    $region39: #{tpu_custom_call.1} parent=1 // pred_check_branch
      %286 = sbr.rel (0) target = $region41
    $region40: #{tpu_custom_call.1} parent=1 // pred_region
      _
    $region41: #{tpu_custom_call.1} parent=1 // pred_fallthru
      _
    // Predicated region
    $region42: #{tpu_custom_call.1} parent=1 // pred_check
      _
    $region43: #{tpu_custom_call.1} parent=1 // pred_check_branch
      %288 = sbr.rel (0) target = $region45
    $region44: #{tpu_custom_call.1} parent=1 // pred_region
      %289 = dma.done [#allocation6], 512
    $region45: #{tpu_custom_call.1} parent=1 // pred_fallthru
      _
    // Predicated region
    $region46: #{tpu_custom_call.1} parent=1 // pred_check
      _
    $region47: #{tpu_custom_call.1} parent=1 // pred_check_branch
      %291 = sbr.rel (0) target = $region49
    $region48: #{tpu_custom_call.1} parent=1 // pred_region
      _
    $region49: #{tpu_custom_call.1} parent=1 // pred_fallthru
      _
    // Predicated region
    $region50: #{tpu_custom_call.1} parent=1 // pred_check
      _
    $region51: #{tpu_custom_call.1} parent=1 // pred_check_branch
      %293 = sbr.rel (0) target = $region53
    $region52: #{tpu_custom_call.1} parent=1 // pred_region
      _
    $region53: #{tpu_custom_call.1} parent=1 // pred_fallthru
      _
    %294 = vsyncpa [#allocation5], 1
    %295 = vsyncpa [#allocation6], 1

</llo_original>
